<compile_context>
chip_gen: v6e
topology: v6e:2x2x1
jax: 0.10.0
libtpu: 0.0.40
codegen_flags: <defaults>
</compile_context>

<pallas_src>
import numpy as np
import jax
import jax.numpy as jnp
from jax.experimental import pallas as pl
from jax.experimental.pallas import tpu as pltpu


def _matvec_kernel(x_ref, w_ref, b_ref, out_ref):
    # x_ref: (TM, D) f32 tile streamed from HBM (double-buffered by Pallas)
    # w_ref: (1, D)  f32 lane-major weight row (tiny, resident)
    # b_ref: (1, 1)  f32 bias (resident)
    # out_ref: (TM, 1) f32
    acc = jnp.sum(x_ref[...] * w_ref[...], axis=-1, keepdims=True)  # VPU mul + XLU reduce
    out_ref[...] = (acc + b_ref[...]).astype(out_ref.dtype)


def _matmul_kernel(x_ref, w_ref, b_ref, out_ref):
    # x_ref: (TM, D); w_ref: (D, N); b_ref: (1, N); out_ref: (TM, N)
    acc = jnp.dot(x_ref[...], w_ref[...], preferred_element_type=jnp.float32)  # MXU
    out_ref[...] = (acc + b_ref[...]).astype(out_ref.dtype)


def _pick_tile_rows(B, D):
    # Target ~4 MiB per x tile so the double-buffered pipeline (~8 MiB) fits
    # the default scoped-VMEM limit on every generation (v5e 16 MiB, v6e/v7x 32 MiB).
    budget_rows = (4 * 1024 * 1024) // (4 * max(D, 1))
    tm = max(8, min(budget_rows, 4096))
    tm = (tm // 8) * 8                 # keep (8, 128) sublane alignment
    if tm >= B:
        return B                       # full-extent block is always layout-legal
    return tm


def linear_forward(x, w, bias):
    """x: (B, D) f32; w: (D, N) f32; bias: (N,) f32 -> (B, N) f32."""
    x = x.astype(jnp.float32)
    B, D = x.shape
    Dw, N = w.shape
    assert Dw == D

    b_row = jnp.reshape(bias, (1, N)).astype(jnp.float32)
    tm = _pick_tile_rows(B, D)
    grid = (pl.cdiv(B, tm),)

    if N == 1:
        kernel = _matvec_kernel
        w_arg = jnp.reshape(w, (1, D)).astype(jnp.float32)    # lane-major weight row
        w_spec = pl.BlockSpec((1, D), lambda i: (0, 0))
    else:
        kernel = _matmul_kernel
        w_arg = w.astype(jnp.float32)
        w_spec = pl.BlockSpec((D, N), lambda i: (0, 0))

    out = pl.pallas_call(
        kernel,
        out_shape=jax.ShapeDtypeStruct((B, N), jnp.float32),
        grid=grid,
        in_specs=[
            pl.BlockSpec((tm, D), lambda i: (i, 0)),           # streamed x tiles
            w_spec,                                            # resident weights
            pl.BlockSpec((1, N), lambda i: (0, 0)),            # resident bias
        ],
        out_specs=pl.BlockSpec((tm, N), lambda i: (i, 0)),
        compiler_params=pltpu.CompilerParams(
            dimension_semantics=("parallel",),                 # 2 TCs on v7x
        ),
    )(x, w_arg, b_row)
    return out


def init_params(key, input_dim, output_dim=1):
    # Matches LinearLayer.__init__: uniform(-scale, scale),
    # scale = sqrt(6 / (input_dim + output_dim)).
    scale = 1.0 * np.sqrt(6.0 / (input_dim + output_dim))
    kw, kb = jax.random.split(key)
    w = jax.random.uniform(kw, (input_dim, output_dim), jnp.float32,
                           minval=-scale, maxval=scale)
    bias = jax.random.uniform(kb, (output_dim,), jnp.float32,
                              minval=-scale, maxval=scale)
    return w, bias


if __name__ == "__main__":
    key = jax.random.PRNGKey(0)
    kx, kp1, kp2 = jax.random.split(key, 3)

    # Case 1: output_dim == 1 (VPU matvec path).
    batch, input_dim = 8, 16
    x = jax.random.normal(kx, (batch, input_dim), jnp.float32)
    w1, b1 = init_params(kp1, input_dim, output_dim=1)
    out1 = linear_forward(x, w1, b1)
    jax.block_until_ready(out1)
    ref1 = x @ w1 + b1
    assert out1.shape == (batch, 1)
    assert jnp.allclose(out1, ref1, atol=1e-5), "output mismatch (N=1)"

    # Case 2: output_dim > 1 (MXU matmul path).
    w2, b2 = init_params(kp2, input_dim, output_dim=4)
    out2 = linear_forward(x, w2, b2)
    jax.block_until_ready(out2)
    ref2 = x @ w2 + b2
    assert out2.shape == (batch, 4)
    assert jnp.allclose(out2, ref2, atol=1e-5), "output mismatch (N=4)"

    print("KERNEL_OK")
</pallas_src>

<mosaic_0001>
module attributes {stable_mosaic.version = 11 : i64} {
  func.func @_matvec_kernel(%arg0: i32, %arg1: memref<8x16xf32, #tpu.memory_space<vmem>>, %arg2: memref<1x16xf32, #tpu.memory_space<vmem>>, %arg3: memref<1x1xf32, #tpu.memory_space<vmem>>, %arg4: memref<8x1xf32, #tpu.memory_space<vmem>>) attributes {dimension_semantics = [#tpu.dimension_semantics<parallel>], iteration_bounds = array<i64: 1>, scalar_prefetch = 0 : i64, scratch_operands = 0 : i64, tpu.core_type = #tpu.core_type<tc>, window_params = [{transform_indices = @transform_0, window_bounds = array<i64: 8, 16>}, {pipeline_mode = #tpu.pipeline_mode<synchronous>, transform_indices = @transform_1, window_bounds = array<i64: 1, 16>}, {pipeline_mode = #tpu.pipeline_mode<synchronous>, transform_indices = @transform_2, window_bounds = array<i64: 1, 1>}, {transform_indices = @transform_3, window_bounds = array<i64: 8, 1>}]} {
    %c0 = arith.constant 0 : index
    %c0_0 = arith.constant 0 : index
    %0 = vector.load %arg1[%c0, %c0_0] : memref<8x16xf32, #tpu.memory_space<vmem>>, vector<8x16xf32>
    %c0_1 = arith.constant 0 : index
    %c0_2 = arith.constant 0 : index
    %1 = vector.load %arg2[%c0_1, %c0_2] : memref<1x16xf32, #tpu.memory_space<vmem>>, vector<1x16xf32>
    %2 = vector.broadcast %1 : vector<1x16xf32> to vector<8x16xf32>
    %3 = arith.mulf %0, %2 : vector<8x16xf32>
    %cst = arith.constant dense<0.000000e+00> : vector<8xf32>
    %4 = vector.multi_reduction <add>, %3, %cst [1] : vector<8x16xf32> to vector<8xf32>
    %5 = vector.shape_cast %4 : vector<8xf32> to vector<8x1xf32>
    %c0_3 = arith.constant 0 : index
    %c0_4 = arith.constant 0 : index
    %6 = vector.load %arg3[%c0_3, %c0_4] : memref<1x1xf32, #tpu.memory_space<vmem>>, vector<1x1xf32>
    %7 = vector.broadcast %6 : vector<1x1xf32> to vector<8x1xf32>
    %8 = arith.addf %5, %7 : vector<8x1xf32>
    %c0_5 = arith.constant 0 : index
    %c0_6 = arith.constant 0 : index
    %9 = vector.load %arg4[%c0_5, %c0_6] : memref<8x1xf32, #tpu.memory_space<vmem>>, vector<8x1xf32>
    tpu.vector_store %arg4[%c0_5, %c0_6], %8 {strides = array<i32>} : memref<8x1xf32, #tpu.memory_space<vmem>>, vector<8x1xf32>,
    return
  }
  func.func @transform_0(%arg0: i32) -> (i32, i32) {
    %c0_i32 = arith.constant 0 : i32
    %c0_i32_0 = arith.constant 0 : i32
    return %arg0, %c0_i32 : i32, i32
  }
  func.func @transform_1(%arg0: i32) -> (i32, i32) {
    %c0_i32 = arith.constant 0 : i32
    %c0_i32_0 = arith.constant 0 : i32
    %c0_i32_1 = arith.constant 0 : i32
    return %c0_i32, %c0_i32_0 : i32, i32
  }
  func.func @transform_2(%arg0: i32) -> (i32, i32) {
    %c0_i32 = arith.constant 0 : i32
    %c0_i32_0 = arith.constant 0 : i32
    %c0_i32_1 = arith.constant 0 : i32
    return %c0_i32, %c0_i32_0 : i32, i32
  }
  func.func @transform_3(%arg0: i32) -> (i32, i32) {
    %c0_i32 = arith.constant 0 : i32
    %c0_i32_0 = arith.constant 0 : i32
    return %arg0, %c0_i32 : i32, i32
  }
}

</mosaic_0001>

<llo_original>
// kernel: tpu_custom_call.1
$region0: #{tpu_custom_call.1}
  #allocation0 [shape = 'u32[]', space=smem, size = 0x4, offset = 0x4, fixed_abs, tag = 'smem constant byte address 0x4 - core index']
  #allocation1 [shape = 'u32[144,128]{1,0:T(1,128)}', space=vmem, size = 0x12000, scoped, tag = 'internal scratch']
  #allocation2 [shape = 'f32[1,1]{1,0:T(1,128)S(1)}', space=vmem, size = 0x200, scoped, tag = 'scoped memory for tpu_custom_call.1']
  %s0 = inlined_call_operand.hbm [shape: f32[8,16], index: 0, kind: input, shape index: {}]
  %s1 = inlined_call_operand.vmem [shape: f32[1,16], index: 1, kind: input, shape index: {}]
  %s2 = inlined_call_operand.<no memory space> [shape: f32[1,1], index: 2, kind: input, shape index: {}]
  %s3 = inlined_call_operand.vmem [shape: f32[8,1], index: 3, kind: output, shape index: {}]
  %s4 = sld [smem:[#allocation0]]
  $region26: #{tpu_custom_call.1} parent=0
    _
  %s6 = ssub.s32 1, %s4
  %s7 = scalar_select 0, %s6, %s4
  %v8 = vstv %s2
  %9 = vst [vmem:[#allocation2] sm:$0x1] %v8
  $region1: #{tpu_custom_call.1} parent=0
    #allocation3 [shape = 'u8[4096]{0}', space=vmem, size = 0x1000, scoped, tag = 'input window, operand 0, single buffered']
    #allocation4 [shape = 's32[1]{0}', space=sflag, size = 0x4, scoped, tag = 'scoped memory for tpu_custom_call.1']
    %10 = vsyncpa [#allocation4], 0
    // Predicated region
    $region2: #{tpu_custom_call.1} parent=1 // pred_check
      _
    $region3: #{tpu_custom_call.1} parent=1 // pred_check_branch
      %12 = sbr.rel (0) target = $region5
    $region4: #{tpu_custom_call.1} parent=1 // pred_region
      %s14 = ssub.s32 128, 128
      %15 = vsyncadd [#allocation4], %s14
      %s17 = sshll.u32 [#allocation3], 4
      %s18 = int_to_ptr.vmem [resolvable:$true] %s17
      %20 = dma.hbm_to_vmem [thread:$0]  %s0, 128, %s18, [#allocation4]
    $region5: #{tpu_custom_call.1} parent=1 // pred_fallthru
      _
    // Predicated region
    $region6: #{tpu_custom_call.1} parent=1 // pred_check
      _
    $region7: #{tpu_custom_call.1} parent=1 // pred_check_branch
      %22 = sbr.rel (0) target = $region9
    $region8: #{tpu_custom_call.1} parent=1 // pred_region
      _
    $region9: #{tpu_custom_call.1} parent=1 // pred_fallthru
      _
    // Predicated region
    $region10: #{tpu_custom_call.1} parent=1 // pred_check
      _
    $region11: #{tpu_custom_call.1} parent=1 // pred_check_branch
      %24 = sbr.rel (0) target = $region13
    $region12: #{tpu_custom_call.1} parent=1 // pred_region
      _
    $region13: #{tpu_custom_call.1} parent=1 // pred_fallthru
      _
    // Predicated region
    $region14: #{tpu_custom_call.1} parent=1 // pred_check
      _
    $region15: #{tpu_custom_call.1} parent=1 // pred_check_branch
      %26 = sbr.rel (0) target = $region17
    $region16: #{tpu_custom_call.1} parent=1 // pred_region
      %27 = dma.done [#allocation4], 128
    $region17: #{tpu_custom_call.1} parent=1 // pred_fallthru
      _
    %v28 = vld [vmem:[#allocation3] sm:$0xff]
    %v29 = vld [vmem:[%s1] sm:$0x1]
    %v31 = vlaneseq
    %v32 = vshrl.u32 %v31, 7
    %v33 = vsub.s32 0, %v32
    %v34 = vrot.slane %v29, %v33
    %v36 = vmul.f32 %v28, %v34
    %vm37 = vcmask 130048
    %v38 = vsel %vm37, %v36, 0.0
    %39 = vadd.xlane.f32.xlu0 %v38
    %v40 = vpop.xlane.xlu0 %39
    %v41 = vld [vmem:[#allocation2] sm:$0x1]
    %v43 = vlaneseq
    %v44 = vshrl.u32 %v43, 7
    %v45 = vsub.s32 0, %v44
    %v46 = vrot.slane %v41, %v45
    %v48 = vadd.f32 %v40, %v46
    %vm49 = vcmask 7168
    %50 = vst.msk [vmem:[%s3] sm:$0xff] %vm49, %v48
    // Predicated region
    $region18: #{tpu_custom_call.1} parent=1 // pred_check
      _
    $region19: #{tpu_custom_call.1} parent=1 // pred_check_branch
      %52 = sbr.rel (0) target = $region21
    $region20: #{tpu_custom_call.1} parent=1 // pred_region
      _
    $region21: #{tpu_custom_call.1} parent=1 // pred_fallthru
      _
    // Predicated region
    $region22: #{tpu_custom_call.1} parent=1 // pred_check
      _
    $region23: #{tpu_custom_call.1} parent=1 // pred_check_branch
      %54 = sbr.rel (0) target = $region25
    $region24: #{tpu_custom_call.1} parent=1 // pred_region
      _
    $region25: #{tpu_custom_call.1} parent=1 // pred_fallthru
      _
    %55 = vsyncpa [#allocation4], 1

</llo_original>
